<compile_context>
chip_gen: v6e
topology: v6e:2x2x1
jax: 0.10.0
libtpu: 0.0.40
codegen_flags: <defaults>
</compile_context>

<pallas_src>
import functools

import jax
import jax.numpy as jnp
from jax.experimental import pallas as pl
from jax.experimental.pallas import tpu as pltpu

LOG_STD_MAX = 2.0
LOG_STD_MIN = -5.0


def _round_up(n, m):
    return ((n + m - 1) // m) * m


def _cdiv(a, b):
    return (a + b - 1) // b


def actor_kernel(act_dim, xz_ref, w1_ref, b1_ref, w2_ref, b2_ref,
                 wh_ref, bh_ref, out_ref):
    # fc1 (+ReLU): one MXU push over the fused [x | z] operand.
    h1 = jnp.dot(xz_ref[...], w1_ref[...], preferred_element_type=jnp.float32)
    h1 = jnp.maximum(h1 + b1_ref[...], 0.0)

    # fc2 (+ReLU)
    h2 = jnp.dot(h1.astype(w2_ref.dtype), w2_ref[...],
                 preferred_element_type=jnp.float32)
    h2 = jnp.maximum(h2 + b2_ref[...], 0.0)

    # fused heads: columns = [mean | log_std | zero padding], lane-dense width.
    head = jnp.dot(h2.astype(wh_ref.dtype), wh_ref[...],
                   preferred_element_type=jnp.float32) + bh_ref[...]

    # tanh + affine only on the log_std lanes (lane mask; EUP slot is free).
    lane = jax.lax.broadcasted_iota(jnp.int32, head.shape, 1)
    log_std = LOG_STD_MIN + 0.5 * (LOG_STD_MAX - LOG_STD_MIN) * (jnp.tanh(head) + 1.0)
    out_ref[...] = jnp.where(lane >= act_dim, log_std, head).astype(out_ref.dtype)


def actor_forward(x, z, p, *, act_dim):
    """x: (B, obs_dim) f32, z: (B, nb_skill) f32 -> (mean, log_std), each (B, act_dim) f32."""
    B, obs_dim = x.shape
    nb_skill = z.shape[1]
    K = obs_dim + nb_skill
    hidden = p["w2"].shape[0]
    head_lanes = p["wh"].shape[1]

    # --- batch-tile selection ------------------------------------------------
    # Cap tiles at 1024 rows (amortizes ~0.35 us/step overhead), pad B by at
    # most one 16-row sublane group, and keep >= 2 grid steps when B is big
    # enough so both v7x TensorCores stay busy.
    TB_CAP = 1024
    n_tiles = _cdiv(B, TB_CAP)
    if n_tiles == 1 and B > 256:
        n_tiles = 2
    TB = _round_up(_cdiv(B, n_tiles), 16)
    B_pad = TB * n_tiles

    # Fused [x | z] operand: concat + bf16 cast + batch pad happen in one small
    # XLA fusion (the cast/pad pass is needed anyway), so the kernel gets a
    # single-K fc1 dot with no extra HBM round-trip.
    xz = jnp.concatenate([x, z], axis=1).astype(p["w1"].dtype)
    if B_pad != B:
        xz = jnp.pad(xz, ((0, B_pad - B), (0, 0)))

    grid = (n_tiles,)
    batch = lambda i: (i, 0)   # tiles along batch
    full = lambda i: (0, 0)    # weights/biases resident across the grid

    in_specs = [
        pl.BlockSpec((TB, K), batch),
        pl.BlockSpec((K, hidden), full),
        pl.BlockSpec((1, hidden), full),
        pl.BlockSpec((hidden, hidden), full),
        pl.BlockSpec((1, hidden), full),
        pl.BlockSpec((hidden, head_lanes), full),
        pl.BlockSpec((1, head_lanes), full),
    ]
    out_specs = pl.BlockSpec((TB, head_lanes), batch)

    weight_bytes = sum(int(v.size) * v.dtype.itemsize for v in (
        p["w1"], p["b1"], p["w2"], p["b2"], p["wh"], p["bh"]))
    io_bytes = B_pad * (K + head_lanes) * 2          # bf16 input + bf16 output
    flops = 2 * B_pad * (K * hidden + hidden * hidden + hidden * head_lanes)
    cost = pl.CostEstimate(flops=flops,
                           transcendentals=B_pad * head_lanes,
                           bytes_accessed=weight_bytes + io_bytes)

    out = pl.pallas_call(
        functools.partial(actor_kernel, act_dim),
        out_shape=jax.ShapeDtypeStruct((B_pad, head_lanes), jnp.bfloat16),
        grid=grid,
        in_specs=in_specs,
        out_specs=out_specs,
        compiler_params=pltpu.CompilerParams(
            dimension_semantics=("parallel",),
            vmem_limit_bytes=32 * 1024 * 1024),
        cost_estimate=cost,
    )(xz, p["w1"], p["b1"], p["w2"], p["b2"], p["wh"], p["bh"])

    mean = out[:B, :act_dim].astype(jnp.float32)
    log_std = out[:B, act_dim:2 * act_dim].astype(jnp.float32)
    return mean, log_std


def init_params(key, obs_dim, nb_skill, act_dim, hidden=256):
    """PyTorch-Linear-style init: U(-1/sqrt(fan_in), 1/sqrt(fan_in)); weights stored (in, out)."""
    def linear(k, fan_in, fan_out):
        kw, kb = jax.random.split(k)
        bound = 1.0 / jnp.sqrt(jnp.float32(fan_in))
        w = jax.random.uniform(kw, (fan_in, fan_out), jnp.float32, -bound, bound)
        b = jax.random.uniform(kb, (1, fan_out), jnp.float32, -bound, bound)
        return w, b

    k1, k2, k3, k4 = jax.random.split(key, 4)
    in_dim = obs_dim + nb_skill
    w1, b1 = linear(k1, in_dim, hidden)
    w2, b2 = linear(k2, hidden, hidden)
    wm, bm = linear(k3, hidden, act_dim)
    wl, bl = linear(k4, hidden, act_dim)
    return dict(w1=w1, b1=b1, w2=w2, b2=b2, wm=wm, bm=bm, wl=wl, bl=bl)


def pack_params(params, weight_dtype=jnp.bfloat16):
    """One-time repack: fuse + lane-pad the two heads, cast weights to bf16."""
    act_dim = params["wm"].shape[1]
    head_lanes = max(128, _round_up(2 * act_dim, 128))

    wh = jnp.concatenate([params["wm"], params["wl"]], axis=1)
    wh = jnp.pad(wh, ((0, 0), (0, head_lanes - 2 * act_dim))).astype(weight_dtype)
    bh = jnp.concatenate([params["bm"], params["bl"]], axis=1)
    bh = jnp.pad(bh, ((0, 0), (0, head_lanes - 2 * act_dim)))

    return dict(w1=params["w1"].astype(weight_dtype), b1=params["b1"],
                w2=params["w2"].astype(weight_dtype), b2=params["b2"],
                wh=wh, bh=bh)


if __name__ == "__main__":
    key = jax.random.PRNGKey(0)
    k_x, k_z, k_p = jax.random.split(key, 3)

    batch, obs_dim, nb_skill, act_dim, hidden = 8, 16, 8, 4, 256
    x = jax.random.normal(k_x, (batch, obs_dim), jnp.float32)
    z = jax.random.normal(k_z, (batch, nb_skill), jnp.float32)
    params = init_params(k_p, obs_dim, nb_skill, act_dim, hidden)
    packed = pack_params(params, weight_dtype=jnp.bfloat16)

    fwd = jax.jit(functools.partial(actor_forward, act_dim=act_dim))
    mean, log_std = fwd(x, z, packed)
    jax.block_until_ready((mean, log_std))
    assert mean.shape == (batch, act_dim) and log_std.shape == (batch, act_dim)

    # Reference 1: matched precision (bf16 operands, f32 accumulation, bf16
    # output rounding) — tight check that the kernel computes what it should.
    bf = jnp.bfloat16
    xz_bf = jnp.concatenate([x, z], axis=1).astype(bf)
    h1 = jnp.maximum(
        jnp.dot(xz_bf, packed["w1"], preferred_element_type=jnp.float32)
        + params["b1"], 0.0)
    h2 = jnp.maximum(
        jnp.dot(h1.astype(bf), packed["w2"], preferred_element_type=jnp.float32)
        + params["b2"], 0.0)
    mean_m = jnp.dot(h2.astype(bf), params["wm"].astype(bf),
                     preferred_element_type=jnp.float32) + params["bm"]
    ls_m = jnp.dot(h2.astype(bf), params["wl"].astype(bf),
                   preferred_element_type=jnp.float32) + params["bl"]
    ls_m = LOG_STD_MIN + 0.5 * (LOG_STD_MAX - LOG_STD_MIN) * (jnp.tanh(ls_m) + 1.0)
    mean_m = mean_m.astype(bf).astype(jnp.float32)
    ls_m = ls_m.astype(bf).astype(jnp.float32)
    assert jnp.allclose(mean, mean_m, atol=1e-2, rtol=1e-2)
    assert jnp.allclose(log_std, ls_m, atol=1e-2, rtol=1e-2)

    # Reference 2: original full-f32 PyTorch semantics — loose tolerance absorbs
    # the deliberate bf16 weight/activation/output casts.
    xz = jnp.concatenate([x, z], axis=1)
    h1f = jnp.maximum(xz @ params["w1"] + params["b1"], 0.0)
    h2f = jnp.maximum(h1f @ params["w2"] + params["b2"], 0.0)
    mean_f = h2f @ params["wm"] + params["bm"]
    ls_f = jnp.tanh(h2f @ params["wl"] + params["bl"])
    ls_f = LOG_STD_MIN + 0.5 * (LOG_STD_MAX - LOG_STD_MIN) * (ls_f + 1.0)
    assert jnp.allclose(mean, mean_f, atol=5e-2, rtol=5e-2)
    assert jnp.allclose(log_std, ls_f, atol=5e-2, rtol=5e-2)

    # Larger, non-tile-aligned batch exercises the multi-step parallel grid.
    xb = jax.random.normal(k_x, (600, obs_dim), jnp.float32)
    zb = jax.random.normal(k_z, (600, nb_skill), jnp.float32)
    mb, lb = fwd(xb, zb, packed)
    jax.block_until_ready((mb, lb))
    assert mb.shape == (600, act_dim) and lb.shape == (600, act_dim)

    # TODO(synk): Actor.get_action() (Normal rsample + tanh-squash log-prob) is
    # host-side distribution logic outside the module's forward(); not a kernel.
    print("KERNEL_OK")
</pallas_src>

<mosaic_0001>
module attributes {stable_mosaic.version = 11 : i64} {
  func.func @actor_kernel(%arg0: i32, %arg1: memref<16x24xbf16, #tpu.memory_space<vmem>>, %arg2: memref<24x256xbf16, #tpu.memory_space<vmem>>, %arg3: memref<1x256xf32, #tpu.memory_space<vmem>>, %arg4: memref<256x256xbf16, #tpu.memory_space<vmem>>, %arg5: memref<1x256xf32, #tpu.memory_space<vmem>>, %arg6: memref<256x128xbf16, #tpu.memory_space<vmem>>, %arg7: memref<1x128xf32, #tpu.memory_space<vmem>>, %arg8: memref<16x128xbf16, #tpu.memory_space<vmem>>) attributes {dimension_semantics = [#tpu.dimension_semantics<parallel>], iteration_bounds = array<i64: 1>, scalar_prefetch = 0 : i64, scratch_operands = 0 : i64, tpu.core_type = #tpu.core_type<tc>, window_params = [{transform_indices = @transform_0, window_bounds = array<i64: 16, 24>}, {pipeline_mode = #tpu.pipeline_mode<synchronous>, transform_indices = @transform_1, window_bounds = array<i64: 24, 256>}, {pipeline_mode = #tpu.pipeline_mode<synchronous>, transform_indices = @transform_2, window_bounds = array<i64: 1, 256>}, {pipeline_mode = #tpu.pipeline_mode<synchronous>, transform_indices = @transform_3, window_bounds = array<i64: 256, 256>}, {pipeline_mode = #tpu.pipeline_mode<synchronous>, transform_indices = @transform_4, window_bounds = array<i64: 1, 256>}, {pipeline_mode = #tpu.pipeline_mode<synchronous>, transform_indices = @transform_5, window_bounds = array<i64: 256, 128>}, {pipeline_mode = #tpu.pipeline_mode<synchronous>, transform_indices = @transform_6, window_bounds = array<i64: 1, 128>}, {transform_indices = @transform_7, window_bounds = array<i64: 16, 128>}]} {
    %c0 = arith.constant 0 : index
    %c0_0 = arith.constant 0 : index
    %0 = vector.load %arg1[%c0, %c0_0] : memref<16x24xbf16, #tpu.memory_space<vmem>>, vector<16x24xbf16>
    %c0_1 = arith.constant 0 : index
    %c0_2 = arith.constant 0 : index
    %1 = vector.load %arg2[%c0_1, %c0_2] : memref<24x256xbf16, #tpu.memory_space<vmem>>, vector<24x256xbf16>
    %cst = arith.constant dense<0.000000e+00> : vector<16x256xf32>
    %2 = tpu.matmul %0, %1, %cst {dimension_numbers = #tpu.dot_dimension_numbers<[1], [0], [0], [1], [0, 0, 1, 1], [], []>} : vector<16x24xbf16>, vector<24x256xbf16>, vector<16x256xf32> -> vector<16x256xf32>
    %c0_3 = arith.constant 0 : index
    %c0_4 = arith.constant 0 : index
    %3 = vector.load %arg3[%c0_3, %c0_4] : memref<1x256xf32, #tpu.memory_space<vmem>>, vector<1x256xf32>
    %4 = vector.broadcast %3 : vector<1x256xf32> to vector<16x256xf32>
    %5 = arith.addf %2, %4 : vector<16x256xf32>
    %cst_5 = arith.constant 0.000000e+00 : f32
    %6 = vector.broadcast %cst_5 : f32 to vector<16x256xf32>
    %7 = arith.maximumf %5, %6 : vector<16x256xf32>
    %8 = arith.truncf %7 : vector<16x256xf32> to vector<16x256xbf16>
    %c0_6 = arith.constant 0 : index
    %c0_7 = arith.constant 0 : index
    %9 = vector.load %arg4[%c0_6, %c0_7] : memref<256x256xbf16, #tpu.memory_space<vmem>>, vector<256x256xbf16>
    %cst_8 = arith.constant dense<0.000000e+00> : vector<16x256xf32>
    %10 = tpu.matmul %8, %9, %cst_8 {dimension_numbers = #tpu.dot_dimension_numbers<[1], [0], [0], [1], [0, 0, 1, 1], [], []>} : vector<16x256xbf16>, vector<256x256xbf16>, vector<16x256xf32> -> vector<16x256xf32>
    %c0_9 = arith.constant 0 : index
    %c0_10 = arith.constant 0 : index
    %11 = vector.load %arg5[%c0_9, %c0_10] : memref<1x256xf32, #tpu.memory_space<vmem>>, vector<1x256xf32>
    %12 = vector.broadcast %11 : vector<1x256xf32> to vector<16x256xf32>
    %13 = arith.addf %10, %12 : vector<16x256xf32>
    %cst_11 = arith.constant 0.000000e+00 : f32
    %14 = vector.broadcast %cst_11 : f32 to vector<16x256xf32>
    %15 = arith.maximumf %13, %14 : vector<16x256xf32>
    %16 = arith.truncf %15 : vector<16x256xf32> to vector<16x256xbf16>
    %c0_12 = arith.constant 0 : index
    %c0_13 = arith.constant 0 : index
    %17 = vector.load %arg6[%c0_12, %c0_13] : memref<256x128xbf16, #tpu.memory_space<vmem>>, vector<256x128xbf16>
    %cst_14 = arith.constant dense<0.000000e+00> : vector<16x128xf32>
    %18 = tpu.matmul %16, %17, %cst_14 {dimension_numbers = #tpu.dot_dimension_numbers<[1], [0], [0], [1], [0, 0, 1, 1], [], []>} : vector<16x256xbf16>, vector<256x128xbf16>, vector<16x128xf32> -> vector<16x128xf32>
    %c0_15 = arith.constant 0 : index
    %c0_16 = arith.constant 0 : index
    %19 = vector.load %arg7[%c0_15, %c0_16] : memref<1x128xf32, #tpu.memory_space<vmem>>, vector<1x128xf32>
    %20 = vector.broadcast %19 : vector<1x128xf32> to vector<16x128xf32>
    %21 = arith.addf %18, %20 : vector<16x128xf32>
    %22 = tpu.iota {dimensions = array<i32: 1>} : vector<16x128xi32>
    %23 = math.tanh %21 : vector<16x128xf32>
    %cst_17 = arith.constant 1.000000e+00 : f32
    %24 = vector.broadcast %cst_17 : f32 to vector<16x128xf32>
    %25 = arith.addf %23, %24 : vector<16x128xf32>
    %cst_18 = arith.constant 3.500000e+00 : f32
    %26 = vector.broadcast %cst_18 : f32 to vector<16x128xf32>
    %27 = arith.mulf %26, %25 : vector<16x128xf32>
    %cst_19 = arith.constant -5.000000e+00 : f32
    %28 = vector.broadcast %cst_19 : f32 to vector<16x128xf32>
    %29 = arith.addf %28, %27 : vector<16x128xf32>
    %c4_i32 = arith.constant 4 : i32
    %30 = vector.broadcast %c4_i32 : i32 to vector<16x128xi32>
    %31 = arith.cmpi sge, %22, %30 : vector<16x128xi32>
    %32 = arith.select %31, %29, %21 : vector<16x128xi1>, vector<16x128xf32>
    %33 = arith.truncf %32 : vector<16x128xf32> to vector<16x128xbf16>
    %c0_20 = arith.constant 0 : index
    %c0_21 = arith.constant 0 : index
    %34 = vector.load %arg8[%c0_20, %c0_21] : memref<16x128xbf16, #tpu.memory_space<vmem>>, vector<16x128xbf16>
    tpu.vector_store %arg8[%c0_20, %c0_21], %33 {strides = array<i32>} : memref<16x128xbf16, #tpu.memory_space<vmem>>, vector<16x128xbf16>,
    return
  }
  func.func @transform_0(%arg0: i32) -> (i32, i32) {
    %c0_i32 = arith.constant 0 : i32
    %c0_i32_0 = arith.constant 0 : i32
    return %arg0, %c0_i32 : i32, i32
  }
  func.func @transform_1(%arg0: i32) -> (i32, i32) {
    %c0_i32 = arith.constant 0 : i32
    %c0_i32_0 = arith.constant 0 : i32
    %c0_i32_1 = arith.constant 0 : i32
    return %c0_i32, %c0_i32_0 : i32, i32
  }
  func.func @transform_2(%arg0: i32) -> (i32, i32) {
    %c0_i32 = arith.constant 0 : i32
    %c0_i32_0 = arith.constant 0 : i32
    %c0_i32_1 = arith.constant 0 : i32
    return %c0_i32, %c0_i32_0 : i32, i32
  }
  func.func @transform_3(%arg0: i32) -> (i32, i32) {
    %c0_i32 = arith.constant 0 : i32
    %c0_i32_0 = arith.constant 0 : i32
    %c0_i32_1 = arith.constant 0 : i32
    return %c0_i32, %c0_i32_0 : i32, i32
  }
  func.func @transform_4(%arg0: i32) -> (i32, i32) {
    %c0_i32 = arith.constant 0 : i32
    %c0_i32_0 = arith.constant 0 : i32
    %c0_i32_1 = arith.constant 0 : i32
    return %c0_i32, %c0_i32_0 : i32, i32
  }
  func.func @transform_5(%arg0: i32) -> (i32, i32) {
    %c0_i32 = arith.constant 0 : i32
    %c0_i32_0 = arith.constant 0 : i32
    %c0_i32_1 = arith.constant 0 : i32
    return %c0_i32, %c0_i32_0 : i32, i32
  }
  func.func @transform_6(%arg0: i32) -> (i32, i32) {
    %c0_i32 = arith.constant 0 : i32
    %c0_i32_0 = arith.constant 0 : i32
    %c0_i32_1 = arith.constant 0 : i32
    return %c0_i32, %c0_i32_0 : i32, i32
  }
  func.func @transform_7(%arg0: i32) -> (i32, i32) {
    %c0_i32 = arith.constant 0 : i32
    %c0_i32_0 = arith.constant 0 : i32
    return %arg0, %c0_i32 : i32, i32
  }
}

</mosaic_0001>

<llo_original>
// kernel: actor_forward.1
$region0: #{actor_forward.1}
  #allocation0 [shape = 'u32[]', space=smem, size = 0x4, offset = 0x4, fixed_abs, tag = 'smem constant byte address 0x4 - core index']
  #allocation1 [shape = 'u32[144,128]{1,0:T(1,128)}', space=vmem, size = 0x12000, scoped, tag = 'internal scratch']
  %s0 = inlined_call_operand.vmem [shape: bf16[16,24], index: 0, kind: input, shape index: {}]
  %s1 = inlined_call_operand.vmem [shape: bf16[24,256], index: 1, kind: input, shape index: {}]
  %s2 = inlined_call_operand.vmem [shape: f32[1,256], index: 2, kind: input, shape index: {}]
  %s3 = inlined_call_operand.hbm [shape: bf16[256,256], index: 3, kind: input, shape index: {}]
  %s4 = inlined_call_operand.vmem [shape: f32[1,256], index: 4, kind: input, shape index: {}]
  %s5 = inlined_call_operand.hbm [shape: bf16[256,128], index: 5, kind: input, shape index: {}]
  %s6 = inlined_call_operand.vmem [shape: f32[1,128], index: 6, kind: input, shape index: {}]
  %s7 = inlined_call_operand.vmem [shape: bf16[16,128], index: 7, kind: output, shape index: {}]
  %s8 = sld [smem:[#allocation0]]
  $region46: #{actor_forward.1} parent=0
    _
  %s10 = ssub.s32 1, %s8
  %s11 = scalar_select 0, %s10, %s8
  $region1: #{actor_forward.1} parent=0
    #allocation2 [shape = 'u8[131072]{0}', space=vmem, size = 0x20000, scoped, tag = 'input window, operand 3, single buffered']
    #allocation3 [shape = 's32[1]{0}', space=sflag, size = 0x4, scoped, tag = 'scoped memory for actor_forward.1']
    #allocation4 [shape = 'u8[65536]{0}', space=vmem, size = 0x10000, scoped, tag = 'input window, operand 5, single buffered']
    #allocation5 [shape = 's32[1]{0}', space=sflag, size = 0x4, scoped, tag = 'scoped memory for actor_forward.1']
    %12 = vsyncpa [#allocation3], 0
    %13 = vsyncpa [#allocation5], 0
    // Predicated region
    $region2: #{actor_forward.1} parent=1 // pred_check
      _
    $region3: #{actor_forward.1} parent=1 // pred_check_branch
      %15 = sbr.rel (0) target = $region5
    $region4: #{actor_forward.1} parent=1 // pred_region
      _
    $region5: #{actor_forward.1} parent=1 // pred_fallthru
      _
    // Predicated region
    $region6: #{actor_forward.1} parent=1 // pred_check
      _
    $region7: #{actor_forward.1} parent=1 // pred_check_branch
      %17 = sbr.rel (0) target = $region9
    $region8: #{actor_forward.1} parent=1 // pred_region
      _
    $region9: #{actor_forward.1} parent=1 // pred_fallthru
      _
    // Predicated region
    $region10: #{actor_forward.1} parent=1 // pred_check
      _
    $region11: #{actor_forward.1} parent=1 // pred_check_branch
      %19 = sbr.rel (0) target = $region13
    $region12: #{actor_forward.1} parent=1 // pred_region
      _
    $region13: #{actor_forward.1} parent=1 // pred_fallthru
      _
    // Predicated region
    $region14: #{actor_forward.1} parent=1 // pred_check
      _
    $region15: #{actor_forward.1} parent=1 // pred_check_branch
      %21 = sbr.rel (0) target = $region17
    $region16: #{actor_forward.1} parent=1 // pred_region
      %s23 = ssub.s32 4096, 4096
      %24 = vsyncadd [#allocation3], %s23
      %s25 = sshll.u32 [#allocation2], 4
      %s26 = int_to_ptr.vmem [resolvable:$true] %s25
      %31 = dma.hbm_to_vmem [thread:$0]  %s3, 4096, %s26, [#allocation3], 128, 128, 8
    $region17: #{actor_forward.1} parent=1 // pred_fallthru
      _
    // Predicated region
    $region18: #{actor_forward.1} parent=1 // pred_check
      _
    $region19: #{actor_forward.1} parent=1 // pred_check_branch
      %33 = sbr.rel (0) target = $region21
    $region20: #{actor_forward.1} parent=1 // pred_region
      _
    $region21: #{actor_forward.1} parent=1 // pred_fallthru
      _
    // Predicated region
    $region22: #{actor_forward.1} parent=1 // pred_check
      _
    $region23: #{actor_forward.1} parent=1 // pred_check_branch
      %35 = sbr.rel (0) target = $region25
    $region24: #{actor_forward.1} parent=1 // pred_region
      %s37 = ssub.s32 2048, 2048
      %38 = vsyncadd [#allocation5], %s37
      %s39 = sshll.u32 [#allocation4], 4
      %s40 = int_to_ptr.vmem [resolvable:$true] %s39
      %45 = dma.hbm_to_vmem [thread:$0]  %s5, 2048, %s40, [#allocation5], 64, 64, 4
    $region25: #{actor_forward.1} parent=1 // pred_fallthru
      _
    // Predicated region
    $region26: #{actor_forward.1} parent=1 // pred_check
      _
    $region27: #{actor_forward.1} parent=1 // pred_check_branch
      %47 = sbr.rel (0) target = $region29
    $region28: #{actor_forward.1} parent=1 // pred_region
      _
    $region29: #{actor_forward.1} parent=1 // pred_fallthru
      _
    // Predicated region
    $region30: #{actor_forward.1} parent=1 // pred_check
      _
    $region31: #{actor_forward.1} parent=1 // pred_check_branch
      %49 = sbr.rel (0) target = $region33
    $region32: #{actor_forward.1} parent=1 // pred_region
      %50 = dma.done [#allocation3], 4096
    $region33: #{actor_forward.1} parent=1 // pred_fallthru
      _
    // Predicated region
    $region34: #{actor_forward.1} parent=1 // pred_check
      _
    $region35: #{actor_forward.1} parent=1 // pred_check_branch
      %52 = sbr.rel (0) target = $region37
    $region36: #{actor_forward.1} parent=1 // pred_region
      %53 = dma.done [#allocation5], 2048
    $region37: #{actor_forward.1} parent=1 // pred_fallthru
      _
    %v55 = vld [vmem:[%s0] sm:$0xf]
    %v56 = vld [vmem:[%s0 + $0x4] sm:$0xf]
    %v57 = vld [vmem:[%s1] sm:$0xff]
    %v58 = vld [vmem:[%s1 + $0x8] sm:$0xff]
    %v59 = vld [vmem:[%s1 + $0x10] sm:$0xff]
    %v60 = vld [vmem:[%s2] sm:$0x3]
    %v62 = vlaneseq
    %v63 = vshrl.u32 %v62, 7
    %v64 = vsub.s32 0, %v63
    %v65 = vrot.slane %v60, %v64
    %v66 = vlaneseq
    %v67 = vshrl.u32 %v66, 7
    %v68 = vsub.s32 1, %v67
    %v69 = vrot.slane %v60, %v68
    %v74 = vunpack.c.l.b16 %v55
    %v75 = vunpack.c.l.b16 %v56
    %v76 = vpack.c.b16 %v75, %v74
    %v80 = vunpack.c.l.b16 %v57
    %v81 = vunpack.c.h.b16 %v57
    %v82 = vunpack.c.l.b16 %v58
    %v83 = vunpack.c.h.b16 %v58
    %v84 = vunpack.c.l.b16 %v59
    %v85 = vunpack.c.h.b16 %v59
    %v86 = vpack.c.b16 %v82, %v80
    %v87 = vpack.c.b16 %v83, %v81
    %v88 = vpack.c.b16 %v84, %v84
    %v89 = vpack.c.b16 %v85, %v85
    %vm92 = vcmask 195584
    %v94 = vsel %vm92, %v76, 0
    %vm96 = vcmask 1043456
    %v98 = vsel %vm96, %v88, 0
    %v101 = vsel %vm96, %v89, 0
    %103 = vmatprep.subr.bf16.mxu0 0
    %104 = vmatpush1.bf16.msra.mxu0 0
    %105 = vmatprep.subr.bf16.mxu0 0
    %106 = vmatpush1.bf16.msra.mxu0 0
    %107 = vmatprep.subr.bf16.mxu0 0
    %108 = vmatpush1.bf16.msra.mxu0 0
    %109 = vmatprep.subr.bf16.mxu0 0
    %110 = vmatpush1.bf16.msra.mxu0 0
    %111 = vmatprep.subr.bf16.mxu0 0
    %112 = vmatpush1.bf16.msra.mxu0 0
    %113 = vmatprep.subr.bf16.mxu0 0
    %114 = vmatpush1.bf16.msra.mxu0 0
    %115 = vmatprep.subr.bf16.mxu0 %v101
    %116 = vmatpush1.bf16.msra.mxu0 %v98
    %117 = vmatprep.subr.bf16.mxu0 %v87
    %118 = vmatpush1.bf16.msra.mxu0 %v86
    %119 = vmatprep.subr.bf16.mxu0 0
    %120 = vmatpush2.bf16.msra.mxu0 0
    %121 = vmatprep.subr.bf16.mxu0 0
    %122 = vmatpush2.bf16.msra.mxu0 0
    %123 = vmatprep.subr.bf16.mxu0 0
    %124 = vmatpush2.bf16.msra.mxu0 0
    %125 = vmatprep.subr.bf16.mxu0 0
    %126 = vmatpush2.bf16.msra.mxu0 0
    %127 = vmatprep.subr.bf16.mxu0 0
    %128 = vmatpush2.bf16.msra.mxu0 0
    %129 = vmatprep.subr.bf16.mxu0 0
    %130 = vmatpush2.bf16.msra.mxu0 0
    %131 = vmatprep.subr.bf16.mxu0 0
    %132 = vmatpush2.bf16.msra.mxu0 0
    %133 = vmatprep.subr.bf16.mxu0 0
    %134 = vmatpush2.bf16.msra.mxu0 0
    %135 = vmatprep.mubr.bf16.mxu0 0
    %136 = vmatmul.mubr.bf16.gmra.mxu0 %v94
    %v137 = vpop.f32.mrf.mxu0
    %v138 = vadd.f32 %v65, %v137
    %v139 = vpop.f32.mrf.mxu0
    %v140 = vadd.f32 %v69, %v139
    %v141 = vpop.f32.mrf.mxu0
    %v142 = vadd.f32 %v65, %v141
    %v143 = vpop.f32.mrf.mxu0
    %v144 = vadd.f32 %v69, %v143
    %145 = vdwg.mxu0
    %v146 = vmax.f32 %v138, 0.0
    %v147 = vmax.f32 %v140, 0.0
    %v148 = vmax.f32 %v142, 0.0
    %v149 = vmax.f32 %v144, 0.0
    %v150 = vpack.c.bf16 %v148, %v146
    %v151 = vpack.c.bf16 %v149, %v147
    %v152 = vld [vmem:[#allocation2] sm:$0xff]
    %v153 = vld [vmem:[#allocation2 + $0x8] sm:$0xff]
    %v154 = vld [vmem:[#allocation2 + $0x10] sm:$0xff]
    %v155 = vld [vmem:[#allocation2 + $0x18] sm:$0xff]
    %v156 = vld [vmem:[#allocation2 + $0x20] sm:$0xff]
    %v157 = vld [vmem:[#allocation2 + $0x28] sm:$0xff]
    %v158 = vld [vmem:[#allocation2 + $0x30] sm:$0xff]
    %v159 = vld [vmem:[#allocation2 + $0x38] sm:$0xff]
    %v160 = vld [vmem:[#allocation2 + $0x40] sm:$0xff]
    %v161 = vld [vmem:[#allocation2 + $0x48] sm:$0xff]
    %v162 = vld [vmem:[#allocation2 + $0x50] sm:$0xff]
    %v163 = vld [vmem:[#allocation2 + $0x58] sm:$0xff]
    %v164 = vld [vmem:[#allocation2 + $0x60] sm:$0xff]
    %v165 = vld [vmem:[#allocation2 + $0x68] sm:$0xff]
    %v166 = vld [vmem:[#allocation2 + $0x70] sm:$0xff]
    %v167 = vld [vmem:[#allocation2 + $0x78] sm:$0xff]
    %v168 = vld [vmem:[#allocation2 + $0x80] sm:$0xff]
    %v169 = vld [vmem:[#allocation2 + $0x88] sm:$0xff]
    %v170 = vld [vmem:[#allocation2 + $0x90] sm:$0xff]
    %v171 = vld [vmem:[#allocation2 + $0x98] sm:$0xff]
    %v172 = vld [vmem:[#allocation2 + $0xa0] sm:$0xff]
    %v173 = vld [vmem:[#allocation2 + $0xa8] sm:$0xff]
    %v174 = vld [vmem:[#allocation2 + $0xb0] sm:$0xff]
    %v175 = vld [vmem:[#allocation2 + $0xb8] sm:$0xff]
    %v176 = vld [vmem:[#allocation2 + $0xc0] sm:$0xff]
    %v177 = vld [vmem:[#allocation2 + $0xc8] sm:$0xff]
    %v178 = vld [vmem:[#allocation2 + $0xd0] sm:$0xff]
    %v179 = vld [vmem:[#allocation2 + $0xd8] sm:$0xff]
    %v180 = vld [vmem:[#allocation2 + $0xe0] sm:$0xff]
    %v181 = vld [vmem:[#allocation2 + $0xe8] sm:$0xff]
    %v182 = vld [vmem:[#allocation2 + $0xf0] sm:$0xff]
    %v183 = vld [vmem:[#allocation2 + $0xf8] sm:$0xff]
    %v184 = vld [vmem:[%s4] sm:$0x3]
    %v186 = vlaneseq
    %v187 = vshrl.u32 %v186, 7
    %v188 = vsub.s32 0, %v187
    %v189 = vrot.slane %v184, %v188
    %v190 = vlaneseq
    %v191 = vshrl.u32 %v190, 7
    %v192 = vsub.s32 1, %v191
    %v193 = vrot.slane %v184, %v192
    %v228 = vunpack.c.l.b16 %v152
    %v229 = vunpack.c.h.b16 %v152
    %v230 = vunpack.c.l.b16 %v153
    %v231 = vunpack.c.h.b16 %v153
    %v232 = vunpack.c.l.b16 %v154
    %v233 = vunpack.c.h.b16 %v154
    %v234 = vunpack.c.l.b16 %v155
    %v235 = vunpack.c.h.b16 %v155
    %v236 = vunpack.c.l.b16 %v156
    %v237 = vunpack.c.h.b16 %v156
    %v238 = vunpack.c.l.b16 %v157
    %v239 = vunpack.c.h.b16 %v157
    %v240 = vunpack.c.l.b16 %v158
    %v241 = vunpack.c.h.b16 %v158
    %v242 = vunpack.c.l.b16 %v159
    %v243 = vunpack.c.h.b16 %v159
    %v244 = vunpack.c.l.b16 %v160
    %v245 = vunpack.c.h.b16 %v160
    %v246 = vunpack.c.l.b16 %v161
    %v247 = vunpack.c.h.b16 %v161
    %v248 = vunpack.c.l.b16 %v162
    %v249 = vunpack.c.h.b16 %v162
    %v250 = vunpack.c.l.b16 %v163
    %v251 = vunpack.c.h.b16 %v163
    %v252 = vunpack.c.l.b16 %v164
    %v253 = vunpack.c.h.b16 %v164
    %v254 = vunpack.c.l.b16 %v165
    %v255 = vunpack.c.h.b16 %v165
    %v256 = vunpack.c.l.b16 %v166
    %v257 = vunpack.c.h.b16 %v166
    %v258 = vunpack.c.l.b16 %v167
    %v259 = vunpack.c.h.b16 %v167
    %v260 = vunpack.c.l.b16 %v168
    %v261 = vunpack.c.h.b16 %v168
    %v262 = vunpack.c.l.b16 %v169
    %v263 = vunpack.c.h.b16 %v169
    %v264 = vunpack.c.l.b16 %v170
    %v265 = vunpack.c.h.b16 %v170
    %v266 = vunpack.c.l.b16 %v171
    %v267 = vunpack.c.h.b16 %v171
    %v268 = vunpack.c.l.b16 %v172
    %v269 = vunpack.c.h.b16 %v172
    %v270 = vunpack.c.l.b16 %v173
    %v271 = vunpack.c.h.b16 %v173
    %v272 = vunpack.c.l.b16 %v174
    %v273 = vunpack.c.h.b16 %v174
    %v274 = vunpack.c.l.b16 %v175
    %v275 = vunpack.c.h.b16 %v175
    %v276 = vunpack.c.l.b16 %v176
    %v277 = vunpack.c.h.b16 %v176
    %v278 = vunpack.c.l.b16 %v177
    %v279 = vunpack.c.h.b16 %v177
    %v280 = vunpack.c.l.b16 %v178
    %v281 = vunpack.c.h.b16 %v178
    %v282 = vunpack.c.l.b16 %v179
    %v283 = vunpack.c.h.b16 %v179
    %v284 = vunpack.c.l.b16 %v180
    %v285 = vunpack.c.h.b16 %v180
    %v286 = vunpack.c.l.b16 %v181
    %v287 = vunpack.c.h.b16 %v181
    %v288 = vunpack.c.l.b16 %v182
    %v289 = vunpack.c.h.b16 %v182
    %v290 = vunpack.c.l.b16 %v183
    %v291 = vunpack.c.h.b16 %v183
    %v292 = vpack.c.b16 %v230, %v228
    %v293 = vpack.c.b16 %v231, %v229
    %v294 = vpack.c.b16 %v234, %v232
    %v295 = vpack.c.b16 %v235, %v233
    %v296 = vpack.c.b16 %v238, %v236
    %v297 = vpack.c.b16 %v239, %v237
    %v298 = vpack.c.b16 %v242, %v240
    %v299 = vpack.c.b16 %v243, %v241
    %v300 = vpack.c.b16 %v246, %v244
    %v301 = vpack.c.b16 %v247, %v245
    %v302 = vpack.c.b16 %v250, %v248
    %v303 = vpack.c.b16 %v251, %v249
    %v304 = vpack.c.b16 %v254, %v252
    %v305 = vpack.c.b16 %v255, %v253
    %v306 = vpack.c.b16 %v258, %v256
    %v307 = vpack.c.b16 %v259, %v257
    %v308 = vpack.c.b16 %v262, %v260
    %v309 = vpack.c.b16 %v263, %v261
    %v310 = vpack.c.b16 %v266, %v264
    %v311 = vpack.c.b16 %v267, %v265
    %v312 = vpack.c.b16 %v270, %v268
    %v313 = vpack.c.b16 %v271, %v269
    %v314 = vpack.c.b16 %v274, %v272
    %v315 = vpack.c.b16 %v275, %v273
    %v316 = vpack.c.b16 %v278, %v276
    %v317 = vpack.c.b16 %v279, %v277
    %v318 = vpack.c.b16 %v282, %v280
    %v319 = vpack.c.b16 %v283, %v281
    %v320 = vpack.c.b16 %v286, %v284
    %v321 = vpack.c.b16 %v287, %v285
    %v322 = vpack.c.b16 %v290, %v288
    %v323 = vpack.c.b16 %v291, %v289
    %356 = vmatprep.subr.bf16.mxu0 %v307
    %357 = vmatpush1.bf16.msra.mxu0 %v306
    %358 = vmatprep.subr.bf16.mxu0 %v305
    %359 = vmatpush1.bf16.msra.mxu0 %v304
    %360 = vmatprep.subr.bf16.mxu0 %v303
    %361 = vmatpush1.bf16.msra.mxu0 %v302
    %362 = vmatprep.subr.bf16.mxu0 %v301
    %363 = vmatpush1.bf16.msra.mxu0 %v300
    %364 = vmatprep.subr.bf16.mxu0 %v299
    %365 = vmatpush1.bf16.msra.mxu0 %v298
    %366 = vmatprep.subr.bf16.mxu0 %v297
    %367 = vmatpush1.bf16.msra.mxu0 %v296
    %368 = vmatprep.subr.bf16.mxu0 %v295
    %369 = vmatpush1.bf16.msra.mxu0 %v294
    %370 = vmatprep.subr.bf16.mxu0 %v293
    %371 = vmatpush1.bf16.msra.mxu0 %v292
    %372 = vmatprep.subr.bf16.mxu0 %v323
    %373 = vmatpush2.bf16.msra.mxu0 %v322
    %374 = vmatprep.subr.bf16.mxu0 %v321
    %375 = vmatpush2.bf16.msra.mxu0 %v320
    %376 = vmatprep.subr.bf16.mxu0 %v319
    %377 = vmatpush2.bf16.msra.mxu0 %v318
    %378 = vmatprep.subr.bf16.mxu0 %v317
    %379 = vmatpush2.bf16.msra.mxu0 %v316
    %380 = vmatprep.subr.bf16.mxu0 %v315
    %381 = vmatpush2.bf16.msra.mxu0 %v314
    %382 = vmatprep.subr.bf16.mxu0 %v313
    %383 = vmatpush2.bf16.msra.mxu0 %v312
    %384 = vmatprep.subr.bf16.mxu0 %v311
    %385 = vmatpush2.bf16.msra.mxu0 %v310
    %386 = vmatprep.subr.bf16.mxu0 %v309
    %387 = vmatpush2.bf16.msra.mxu0 %v308
    %388 = vmatprep.mubr.bf16.mxu0 %v151
    %389 = vmatmul.mubr.bf16.gmra.mxu0 %v150
    %v390 = vpop.f32.mrf.mxu0
    %v391 = vadd.f32 %v189, %v390
    %v392 = vpop.f32.mrf.mxu0
    %v393 = vadd.f32 %v193, %v392
    %v394 = vpop.f32.mrf.mxu0
    %v395 = vadd.f32 %v189, %v394
    %v396 = vpop.f32.mrf.mxu0
    %v397 = vadd.f32 %v193, %v396
    %398 = vdwg.mxu0
    %v399 = vmax.f32 %v391, 0.0
    %v400 = vmax.f32 %v393, 0.0
    %v401 = vmax.f32 %v395, 0.0
    %v402 = vmax.f32 %v397, 0.0
    %v403 = vpack.c.bf16 %v401, %v399
    %v404 = vpack.c.bf16 %v402, %v400
    %v405 = vld [vmem:[#allocation4] sm:$0xf]
    %v406 = vld [vmem:[#allocation4 + $0x4] sm:$0xf]
    %v407 = vld [vmem:[#allocation4 + $0x8] sm:$0xf]
    %v408 = vld [vmem:[#allocation4 + $0xc] sm:$0xf]
    %v409 = vld [vmem:[#allocation4 + $0x10] sm:$0xf]
    %v410 = vld [vmem:[#allocation4 + $0x14] sm:$0xf]
    %v411 = vld [vmem:[#allocation4 + $0x18] sm:$0xf]
    %v412 = vld [vmem:[#allocation4 + $0x1c] sm:$0xf]
    %v413 = vld [vmem:[#allocation4 + $0x20] sm:$0xf]
    %v414 = vld [vmem:[#allocation4 + $0x24] sm:$0xf]
    %v415 = vld [vmem:[#allocation4 + $0x28] sm:$0xf]
    %v416 = vld [vmem:[#allocation4 + $0x2c] sm:$0xf]
    %v417 = vld [vmem:[#allocation4 + $0x30] sm:$0xf]
    %v418 = vld [vmem:[#allocation4 + $0x34] sm:$0xf]
    %v419 = vld [vmem:[#allocation4 + $0x38] sm:$0xf]
    %v420 = vld [vmem:[#allocation4 + $0x3c] sm:$0xf]
    %v421 = vld [vmem:[#allocation4 + $0x40] sm:$0xf]
    %v422 = vld [vmem:[#allocation4 + $0x44] sm:$0xf]
    %v423 = vld [vmem:[#allocation4 + $0x48] sm:$0xf]
    %v424 = vld [vmem:[#allocation4 + $0x4c] sm:$0xf]
    %v425 = vld [vmem:[#allocation4 + $0x50] sm:$0xf]
    %v426 = vld [vmem:[#allocation4 + $0x54] sm:$0xf]
    %v427 = vld [vmem:[#allocation4 + $0x58] sm:$0xf]
    %v428 = vld [vmem:[#allocation4 + $0x5c] sm:$0xf]
    %v429 = vld [vmem:[#allocation4 + $0x60] sm:$0xf]
    %v430 = vld [vmem:[#allocation4 + $0x64] sm:$0xf]
    %v431 = vld [vmem:[#allocation4 + $0x68] sm:$0xf]
    %v432 = vld [vmem:[#allocation4 + $0x6c] sm:$0xf]
    %v433 = vld [vmem:[#allocation4 + $0x70] sm:$0xf]
    %v434 = vld [vmem:[#allocation4 + $0x74] sm:$0xf]
    %v435 = vld [vmem:[#allocation4 + $0x78] sm:$0xf]
    %v436 = vld [vmem:[#allocation4 + $0x7c] sm:$0xf]
    %v437 = vld [vmem:[%s6] sm:$0x1]
    %v439 = vlaneseq
    %v440 = vshrl.u32 %v439, 7
    %v441 = vsub.s32 0, %v440
    %v442 = vrot.slane %v437, %v441
    %v476 = vunpack.c.l.b16 %v405
    %v477 = vunpack.c.l.b16 %v406
    %v478 = vunpack.c.l.b16 %v407
    %v479 = vunpack.c.l.b16 %v408
    %v480 = vunpack.c.l.b16 %v409
    %v481 = vunpack.c.l.b16 %v410
    %v482 = vunpack.c.l.b16 %v411
    %v483 = vunpack.c.l.b16 %v412
    %v484 = vunpack.c.l.b16 %v413
    %v485 = vunpack.c.l.b16 %v414
    %v486 = vunpack.c.l.b16 %v415
    %v487 = vunpack.c.l.b16 %v416
    %v488 = vunpack.c.l.b16 %v417
    %v489 = vunpack.c.l.b16 %v418
    %v490 = vunpack.c.l.b16 %v419
    %v491 = vunpack.c.l.b16 %v420
    %v492 = vunpack.c.l.b16 %v421
    %v493 = vunpack.c.l.b16 %v422
    %v494 = vunpack.c.l.b16 %v423
    %v495 = vunpack.c.l.b16 %v424
    %v496 = vunpack.c.l.b16 %v425
    %v497 = vunpack.c.l.b16 %v426
    %v498 = vunpack.c.l.b16 %v427
    %v499 = vunpack.c.l.b16 %v428
    %v500 = vunpack.c.l.b16 %v429
    %v501 = vunpack.c.l.b16 %v430
    %v502 = vunpack.c.l.b16 %v431
    %v503 = vunpack.c.l.b16 %v432
    %v504 = vunpack.c.l.b16 %v433
    %v505 = vunpack.c.l.b16 %v434
    %v506 = vunpack.c.l.b16 %v435
    %v507 = vunpack.c.l.b16 %v436
    %v508 = vpack.c.b16 %v477, %v476
    %v509 = vpack.c.b16 %v479, %v478
    %v510 = vpack.c.b16 %v481, %v480
    %v511 = vpack.c.b16 %v483, %v482
    %v512 = vpack.c.b16 %v485, %v484
    %v513 = vpack.c.b16 %v487, %v486
    %v514 = vpack.c.b16 %v489, %v488
    %v515 = vpack.c.b16 %v491, %v490
    %v516 = vpack.c.b16 %v493, %v492
    %v517 = vpack.c.b16 %v495, %v494
    %v518 = vpack.c.b16 %v497, %v496
    %v519 = vpack.c.b16 %v499, %v498
    %v520 = vpack.c.b16 %v501, %v500
    %v521 = vpack.c.b16 %v503, %v502
    %v522 = vpack.c.b16 %v505, %v504
    %v523 = vpack.c.b16 %v507, %v506
    %540 = vmatprep.subr.bf16.mxu0 0
    %541 = vmatpush1.bf16.msra.mxu0 %v515
    %542 = vmatprep.subr.bf16.mxu0 0
    %543 = vmatpush1.bf16.msra.mxu0 %v514
    %544 = vmatprep.subr.bf16.mxu0 0
    %545 = vmatpush1.bf16.msra.mxu0 %v513
    %546 = vmatprep.subr.bf16.mxu0 0
    %547 = vmatpush1.bf16.msra.mxu0 %v512
    %548 = vmatprep.subr.bf16.mxu0 0
    %549 = vmatpush1.bf16.msra.mxu0 %v511
    %550 = vmatprep.subr.bf16.mxu0 0
    %551 = vmatpush1.bf16.msra.mxu0 %v510
    %552 = vmatprep.subr.bf16.mxu0 0
    %553 = vmatpush1.bf16.msra.mxu0 %v509
    %554 = vmatprep.subr.bf16.mxu0 0
    %555 = vmatpush1.bf16.msra.mxu0 %v508
    %556 = vmatprep.subr.bf16.mxu0 0
    %557 = vmatpush2.bf16.msra.mxu0 %v523
    %558 = vmatprep.subr.bf16.mxu0 0
    %559 = vmatpush2.bf16.msra.mxu0 %v522
    %560 = vmatprep.subr.bf16.mxu0 0
    %561 = vmatpush2.bf16.msra.mxu0 %v521
    %562 = vmatprep.subr.bf16.mxu0 0
    %563 = vmatpush2.bf16.msra.mxu0 %v520
    %564 = vmatprep.subr.bf16.mxu0 0
    %565 = vmatpush2.bf16.msra.mxu0 %v519
    %566 = vmatprep.subr.bf16.mxu0 0
    %567 = vmatpush2.bf16.msra.mxu0 %v518
    %568 = vmatprep.subr.bf16.mxu0 0
    %569 = vmatpush2.bf16.msra.mxu0 %v517
    %570 = vmatprep.subr.bf16.mxu0 0
    %571 = vmatpush2.bf16.msra.mxu0 %v516
    %572 = vmatprep.mubr.bf16.mxu0 %v404
    %573 = vmatmul.mubr.bf16.gmra.mxu0 %v403
    %v574 = vpop.f32.mrf.mxu0
    %v575 = vadd.f32 %v442, %v574
    %v576 = vpop.f32.mrf.mxu0
    %v577 = vpop.f32.mrf.mxu0
    %v578 = vadd.f32 %v442, %v577
    %v579 = vpop.f32.mrf.mxu0
    %580 = vdwg.mxu0
    %v581 = vlaneseq
    %v582 = vand.u32 %v581, 127
    %v583 = vtanh.pop %v575
    %v584 = vtanh.pop %v578
    %v585 = vadd.f32 %v583, 1.0
    %v586 = vadd.f32 %v584, 1.0
    %v587 = vmul.f32 %v585, 3.5
    %v588 = vmul.f32 %v586, 3.5
    %v589 = vadd.f32 %v587, -5.0
    %v590 = vadd.f32 %v588, -5.0
    %vm591 = vcmp.ge.s32.totalorder %v582, 4
    %v592 = vsel %vm591, %v589, %v575
    %v593 = vsel %vm591, %v590, %v578
    %v594 = vpack.c.bf16 %v593, %v592
    %v596 = vunpack.c.l.b16 %v594
    %v597 = vunpack.c.h.b16 %v594
    %v598 = vpack.c.b16 %v596, %v596
    %v599 = vpack.c.b16 %v597, %v597
    %602 = vst [vmem:[%s7] sm:$0xf] %v598
    %603 = vst [vmem:[%s7 + $0x4] sm:$0xf] %v599
    // Predicated region
    $region38: #{actor_forward.1} parent=1 // pred_check
      _
    $region39: #{actor_forward.1} parent=1 // pred_check_branch
      %605 = sbr.rel (0) target = $region41
    $region40: #{actor_forward.1} parent=1 // pred_region
      _
    $region41: #{actor_forward.1} parent=1 // pred_fallthru
      _
    // Predicated region
    $region42: #{actor_forward.1} parent=1 // pred_check
      _
    $region43: #{actor_forward.1} parent=1 // pred_check_branch
      %607 = sbr.rel (0) target = $region45
    $region44: #{actor_forward.1} parent=1 // pred_region
      _
    $region45: #{actor_forward.1} parent=1 // pred_fallthru
      _
    %608 = vsyncpa [#allocation3], 1
    %609 = vsyncpa [#allocation5], 1

</llo_original>
